<compile_context>
chip_gen: v7x
topology: tpu7x:2x2x1
jax: 0.10.0
libtpu: 0.0.40
codegen_flags: <defaults>
</compile_context>

<pallas_src>
import jax
import jax.numpy as jnp
from jax.experimental import pallas as pl
from jax.experimental.pallas import tpu as pltpu


def _occlude_kernel(x_ref, m_ref, o_ref):
    # Single lane-dense select per block: keep pixels whose flattened (H*W)
    # position falls inside the central third of the patch grid, zero the rest.
    o_ref[...] = jnp.where(m_ref[...] != 0, x_ref[...], 0).astype(o_ref.dtype)


def _choose_row_tile(n_rows, row_bytes, itemsize):
    """Pick the (B*C)-axis block size.

    Sublane-tile aligned for the dtype, divides n_rows evenly, keeps the
    double-buffered (in + out) footprint under ~8 MiB, and (when possible)
    leaves >= 2 grid steps so v7x can shard the parallel axis across both
    TensorCores.
    """
    sub = max(8, 32 // max(int(itemsize), 1))   # 8 (f32) / 16 (bf16) / 32 (int8)
    if n_rows < 2 * sub or n_rows % sub != 0:
        return n_rows                            # full axis: always a legal block dim
    budget = 8 * 1024 * 1024                     # conservative vs. v7x 64 MiB VMEM
    max_rows = max(sub, budget // max(1, 4 * row_bytes))
    cap = min(max_rows, n_rows // 2)
    tile = sub
    t = sub
    while t <= cap:
        if n_rows % t == 0:
            tile = t
        t += sub
    return tile


def patch_embed_outer_occlude(x, patch_size=16):
    """x: (B, C, H, W). Returns x with all patches outside the central third
    of the patch grid zeroed (same shape, same dtype)."""
    B, C, H, W = x.shape
    P = patch_size
    Hp, Wp = H // P, W // P
    assert Hp * P == H and Wp * P == W, "image size must be divisible by patch size"

    N = B * C
    L = H * W
    itemsize = jnp.dtype(x.dtype).itemsize

    # Lane-dense view: one image per row, H*W lanes per row.
    x2 = x.reshape(N, L)

    # Keep-mask over the flattened pixel axis: pixel (h_img, w_img) is kept iff
    # its patch indices (h_img//P, w_img//P) lie strictly inside the central
    # third of the patch grid. Integer forms 3*idx > n and 3*idx < 2*n are
    # exactly equivalent to outer_occlude's float comparisons idx > n/3, idx < 2n/3.
    hp = jnp.arange(H, dtype=jnp.int32) // P
    wp = jnp.arange(W, dtype=jnp.int32) // P
    keep_h = (3 * hp > Hp) & (3 * hp < 2 * Hp)
    keep_w = (3 * wp > Wp) & (3 * wp < 2 * Wp)
    mask = (keep_h[:, None] & keep_w[None, :]).reshape(1, L).astype(x.dtype)

    bc_tile = _choose_row_tile(N, L * itemsize, itemsize)
    grid = (N // bc_tile,)

    out2 = pl.pallas_call(
        _occlude_kernel,
        out_shape=jax.ShapeDtypeStruct((N, L), x.dtype),
        grid=grid,
        in_specs=[
            pl.BlockSpec((bc_tile, L), lambda i: (i, 0)),   # image slab
            pl.BlockSpec((1, L), lambda i: (0, 0)),         # shared mask (fetched once)
        ],
        out_specs=pl.BlockSpec((bc_tile, L), lambda i: (i, 0)),
        compiler_params=pltpu.CompilerParams(
            dimension_semantics=("parallel",)),
        cost_estimate=pl.CostEstimate(
            flops=0, transcendentals=0,
            bytes_accessed=int(2 * N * L * itemsize + L * itemsize)),
    )(x2, mask)

    return out2.reshape(B, C, H, W)


def reference_patch_embed_outer_occlude(x, patch_size=16):
    """Pure-JAX reference replicating the rearrange -> outer_occlude -> rearrange chain."""
    B, C, H, W = x.shape
    P = patch_size
    Hp, Wp = H // P, W // P
    # b c (h p1) (w p2) -> b w h p1 p2 c
    y = x.reshape(B, C, Hp, P, Wp, P).transpose(0, 4, 2, 3, 5, 1)   # (B, Wp, Hp, P, P, C)
    j = jnp.arange(Wp)  # "W" axis in outer_occlude (patch column)
    k = jnp.arange(Hp)  # "H" axis in outer_occlude (patch row)
    keep = ((3 * j > Wp) & (3 * j < 2 * Wp))[:, None] & \
           ((3 * k > Hp) & (3 * k < 2 * Hp))[None, :]               # (Wp, Hp)
    y = jnp.where(keep[None, :, :, None, None, None], y, 0).astype(x.dtype)
    # b w h p1 p2 c -> b c (h p1) (w p2)
    return y.transpose(0, 5, 2, 3, 1, 4).reshape(B, C, H, W)


if __name__ == "__main__":
    # Small shapes consistent with the module: 32x32 image, 4x4 patches ->
    # 8x8 patch grid, so the kept central region is the 3x3 block of patches
    # with indices {3, 4, 5} along each axis.
    B, C, IMG, PATCH = 2, 3, 32, 4
    key = jax.random.PRNGKey(0)
    x = jax.random.normal(key, (B, C, IMG, IMG), dtype=jnp.float32)

    out = patch_embed_outer_occlude(x, patch_size=PATCH)
    out = jax.block_until_ready(out)

    ref = reference_patch_embed_outer_occlude(x, patch_size=PATCH)
    assert out.shape == x.shape
    assert jnp.allclose(out, ref), "Pallas output does not match reference"
    # sanity: the outer (occluded) band really is zero
    assert float(jnp.abs(out[:, :, :3 * PATCH, :]).max()) == 0.0

    print("KERNEL_OK")
</pallas_src>

<mosaic_0001>
module attributes {stable_mosaic.version = 11 : i64} {
  func.func @_occlude_kernel(%arg0: i32, %arg1: memref<6x1024xf32, #tpu.memory_space<vmem>>, %arg2: memref<1x1024xf32, #tpu.memory_space<vmem>>, %arg3: memref<6x1024xf32, #tpu.memory_space<vmem>>) attributes {dimension_semantics = [#tpu.dimension_semantics<parallel>], iteration_bounds = array<i64: 1>, scalar_prefetch = 0 : i64, scratch_operands = 0 : i64, tpu.core_type = #tpu.core_type<tc>, window_params = [{transform_indices = @transform_0, window_bounds = array<i64: 6, 1024>}, {pipeline_mode = #tpu.pipeline_mode<synchronous>, transform_indices = @transform_1, window_bounds = array<i64: 1, 1024>}, {transform_indices = @transform_2, window_bounds = array<i64: 6, 1024>}]} {
    %c0 = arith.constant 0 : index
    %c0_0 = arith.constant 0 : index
    %0 = vector.load %arg2[%c0, %c0_0] : memref<1x1024xf32, #tpu.memory_space<vmem>>, vector<1x1024xf32>
    %cst = arith.constant 0.000000e+00 : f32
    %1 = vector.broadcast %cst : f32 to vector<1x1024xf32>
    %2 = arith.cmpf one, %0, %1 : vector<1x1024xf32>
    %c0_1 = arith.constant 0 : index
    %c0_2 = arith.constant 0 : index
    %3 = vector.load %arg1[%c0_1, %c0_2] : memref<6x1024xf32, #tpu.memory_space<vmem>>, vector<6x1024xf32>
    %c0_i32 = arith.constant 0 : i32
    %4 = arith.sitofp %c0_i32 : i32 to f32
    %5 = vector.shape_cast %2 : vector<1x1024xi1> to vector<1x1024xi1>
    %6 = vector.broadcast %5 : vector<1x1024xi1> to vector<6x1024xi1>
    %7 = vector.broadcast %4 : f32 to vector<6x1024xf32>
    %8 = arith.select %6, %3, %7 : vector<6x1024xi1>, vector<6x1024xf32>
    %c0_3 = arith.constant 0 : index
    %c0_4 = arith.constant 0 : index
    %9 = vector.load %arg3[%c0_3, %c0_4] : memref<6x1024xf32, #tpu.memory_space<vmem>>, vector<6x1024xf32>
    tpu.vector_store %arg3[%c0_3, %c0_4], %8 {strides = array<i32>} : memref<6x1024xf32, #tpu.memory_space<vmem>>, vector<6x1024xf32>,
    return
  }
  func.func @transform_0(%arg0: i32) -> (i32, i32) {
    %c0_i32 = arith.constant 0 : i32
    %c0_i32_0 = arith.constant 0 : i32
    return %arg0, %c0_i32 : i32, i32
  }
  func.func @transform_1(%arg0: i32) -> (i32, i32) {
    %c0_i32 = arith.constant 0 : i32
    %c0_i32_0 = arith.constant 0 : i32
    %c0_i32_1 = arith.constant 0 : i32
    return %c0_i32, %c0_i32_0 : i32, i32
  }
  func.func @transform_2(%arg0: i32) -> (i32, i32) {
    %c0_i32 = arith.constant 0 : i32
    %c0_i32_0 = arith.constant 0 : i32
    return %arg0, %c0_i32 : i32, i32
  }
}

</mosaic_0001>

<llo_original>
// kernel: tpu_custom_call.1
$region0: #{tpu_custom_call.1}
  #allocation0 [shape = 'u32[]', space=smem, size = 0x4, offset = 0x4, fixed_abs, tag = 'smem constant byte address 0x4 - core index']
  #allocation1 [shape = 'u32[144,128]{1,0:T(1,128)}', space=vmem, size = 0x12000, scoped, tag = 'internal scratch']
  %s0 = inlined_call_operand.hbm [shape: f32[6,1024], index: 0, kind: input, shape index: {}]
  %s1 = inlined_call_operand.hbm [shape: f32[1,1024], index: 1, kind: input, shape index: {}]
  %s2 = inlined_call_operand.hbm [shape: f32[6,1024], index: 2, kind: output, shape index: {}]
  %s3 = sld [smem:[#allocation0]]
  $region26: #{tpu_custom_call.1} parent=0
    _
  %s5 = ssub.s32 1, %s3
  %s6 = scalar_select 0, %s5, %s3
  $region1: #{tpu_custom_call.1} parent=0
    #allocation2 [shape = 'u8[32768]{0}', space=vmem, size = 0x8000, scoped, tag = 'input window, operand 0, single buffered']
    #allocation3 [shape = 's32[1]{0}', space=sflag, size = 0x4, scoped, tag = 'scoped memory for tpu_custom_call.1']
    #allocation4 [shape = 's32[1]{0}', space=sflag, size = 0x4, scoped, tag = 'scoped memory for tpu_custom_call.1']
    #allocation5 [shape = 'u8[4096]{0}', space=vmem, size = 0x1000, scoped, tag = 'input window, operand 1, single buffered']
    #allocation6 [shape = 's32[1]{0}', space=sflag, size = 0x4, scoped, tag = 'scoped memory for tpu_custom_call.1']
    #allocation7 [shape = 'u8[32768]{0}', space=vmem, size = 0x8000, scoped, tag = 'output window, operand 0, single buffered']
    %7 = vsyncpa [#allocation3], 0
    %8 = vsyncpa [#allocation6], 0
    %9 = vsyncpa [#allocation4], 0
    // Predicated region
    $region2: #{tpu_custom_call.1} parent=1 // pred_check
      _
    $region3: #{tpu_custom_call.1} parent=1 // pred_check_branch
      %11 = sbr.rel (0) target = $region5
    $region4: #{tpu_custom_call.1} parent=1 // pred_region
      %s13 = ssub.s32 1024, 1024
      %14 = vsyncadd [#allocation3], %s13
      %s16 = sshll.u32 [#allocation2], 4
      %s17 = int_to_ptr.vmem [resolvable:$true] %s16
      %19 = dma.hbm_to_vmem [thread:$0]  %s0, 1024, %s17, [#allocation3]
    $region5: #{tpu_custom_call.1} parent=1 // pred_fallthru
      _
    // Predicated region
    $region6: #{tpu_custom_call.1} parent=1 // pred_check
      _
    $region7: #{tpu_custom_call.1} parent=1 // pred_check_branch
      %21 = sbr.rel (0) target = $region9
    $region8: #{tpu_custom_call.1} parent=1 // pred_region
      %s23 = ssub.s32 128, 128
      %24 = vsyncadd [#allocation6], %s23
      %s26 = sshll.u32 [#allocation5], 4
      %s27 = int_to_ptr.vmem [resolvable:$true] %s26
      %29 = dma.hbm_to_vmem [thread:$0]  %s1, 128, %s27, [#allocation6]
    $region9: #{tpu_custom_call.1} parent=1 // pred_fallthru
      _
    // Predicated region
    $region10: #{tpu_custom_call.1} parent=1 // pred_check
      _
    $region11: #{tpu_custom_call.1} parent=1 // pred_check_branch
      %31 = sbr.rel (0) target = $region13
    $region12: #{tpu_custom_call.1} parent=1 // pred_region
      %32 = dma.done [#allocation3], 1024
    $region13: #{tpu_custom_call.1} parent=1 // pred_fallthru
      _
    // Predicated region
    $region14: #{tpu_custom_call.1} parent=1 // pred_check
      _
    $region15: #{tpu_custom_call.1} parent=1 // pred_check_branch
      %34 = sbr.rel (0) target = $region17
    $region16: #{tpu_custom_call.1} parent=1 // pred_region
      %35 = dma.done [#allocation6], 128
    $region17: #{tpu_custom_call.1} parent=1 // pred_fallthru
      _
    %v36 = vld [vmem:[#allocation5] sm:$0xff]
    %vm37 = vcmp.ne.f32.partialorder %v36, 0.0
    %v38 = vld [vmem:[#allocation2] sm:$0x3f]
    %v39 = vld [vmem:[#allocation2 + $0x8] sm:$0x3f]
    %v40 = vld [vmem:[#allocation2 + $0x10] sm:$0x3f]
    %v41 = vld [vmem:[#allocation2 + $0x18] sm:$0x3f]
    %v42 = vld [vmem:[#allocation2 + $0x20] sm:$0x3f]
    %v43 = vld [vmem:[#allocation2 + $0x28] sm:$0x3f]
    %v44 = vld [vmem:[#allocation2 + $0x30] sm:$0x3f]
    %v45 = vld [vmem:[#allocation2 + $0x38] sm:$0x3f]
    %v46 = vsel %vm37, 1, 0
    %v47 = vlaneseq
    %v48 = vshrl.u32 %v47, 7
    %v49 = vsub.s32 0, %v48
    %v50 = vrot.slane %v46, %v49
    %v51 = vlaneseq
    %v52 = vshrl.u32 %v51, 7
    %v53 = vsub.s32 1, %v52
    %v54 = vrot.slane %v46, %v53
    %v55 = vlaneseq
    %v56 = vshrl.u32 %v55, 7
    %v57 = vsub.s32 2, %v56
    %v58 = vrot.slane %v46, %v57
    %v59 = vlaneseq
    %v60 = vshrl.u32 %v59, 7
    %v61 = vsub.s32 3, %v60
    %v62 = vrot.slane %v46, %v61
    %v63 = vlaneseq
    %v64 = vshrl.u32 %v63, 7
    %v65 = vsub.s32 4, %v64
    %v66 = vrot.slane %v46, %v65
    %v67 = vlaneseq
    %v68 = vshrl.u32 %v67, 7
    %v69 = vsub.s32 5, %v68
    %v70 = vrot.slane %v46, %v69
    %v71 = vlaneseq
    %v72 = vshrl.u32 %v71, 7
    %v73 = vsub.s32 6, %v72
    %v74 = vrot.slane %v46, %v73
    %v75 = vlaneseq
    %v76 = vshrl.u32 %v75, 7
    %v77 = vsub.s32 7, %v76
    %v78 = vrot.slane %v46, %v77
    %vm79 = vcmp.eq.s32.totalorder %v50, 1
    %vm80 = vcmp.eq.s32.totalorder %v54, 1
    %vm81 = vcmp.eq.s32.totalorder %v58, 1
    %vm82 = vcmp.eq.s32.totalorder %v62, 1
    %vm83 = vcmp.eq.s32.totalorder %v66, 1
    %vm84 = vcmp.eq.s32.totalorder %v70, 1
    %vm85 = vcmp.eq.s32.totalorder %v74, 1
    %vm86 = vcmp.eq.s32.totalorder %v78, 1
    %v87 = vsel %vm79, %v38, 0.0
    %v88 = vsel %vm80, %v39, 0.0
    %v89 = vsel %vm81, %v40, 0.0
    %v90 = vsel %vm82, %v41, 0.0
    %v91 = vsel %vm83, %v42, 0.0
    %v92 = vsel %vm84, %v43, 0.0
    %v93 = vsel %vm85, %v44, 0.0
    %v94 = vsel %vm86, %v45, 0.0
    %95 = vst [vmem:[#allocation7] sm:$0x3f] %v87
    %96 = vst [vmem:[#allocation7 + $0x8] sm:$0x3f] %v88
    %97 = vst [vmem:[#allocation7 + $0x10] sm:$0x3f] %v89
    %98 = vst [vmem:[#allocation7 + $0x18] sm:$0x3f] %v90
    %99 = vst [vmem:[#allocation7 + $0x20] sm:$0x3f] %v91
    %100 = vst [vmem:[#allocation7 + $0x28] sm:$0x3f] %v92
    %101 = vst [vmem:[#allocation7 + $0x30] sm:$0x3f] %v93
    %102 = vst [vmem:[#allocation7 + $0x38] sm:$0x3f] %v94
    // Predicated region
    $region18: #{tpu_custom_call.1} parent=1 // pred_check
      _
    $region19: #{tpu_custom_call.1} parent=1 // pred_check_branch
      %104 = sbr.rel (0) target = $region21
    $region20: #{tpu_custom_call.1} parent=1 // pred_region
      %s106 = ssub.s32 1024, 1024
      %107 = vsyncadd [#allocation4], %s106
      %s109 = sshll.u32 [#allocation7], 4
      %s110 = int_to_ptr.vmem [resolvable:$true] %s109
      %112 = dma.vmem_to_hbm [thread:$0]  %s110, 1024, %s2, [#allocation4]
    $region21: #{tpu_custom_call.1} parent=1 // pred_fallthru
      _
    // Predicated region
    $region22: #{tpu_custom_call.1} parent=1 // pred_check
      _
    $region23: #{tpu_custom_call.1} parent=1 // pred_check_branch
      %114 = sbr.rel (0) target = $region25
    $region24: #{tpu_custom_call.1} parent=1 // pred_region
      %115 = dma.done [#allocation4], 1024
    $region25: #{tpu_custom_call.1} parent=1 // pred_fallthru
      _
    %116 = vsyncpa [#allocation3], 1
    %117 = vsyncpa [#allocation6], 1
    %118 = vsyncpa [#allocation4], 1

</llo_original>
